<compile_context>
chip_gen: v5e
topology: v5e:2x2
jax: 0.10.0
libtpu: 0.0.40
codegen_flags: <defaults>
</compile_context>

<pallas_src>
import functools

import jax
import jax.numpy as jnp
import numpy as np
from jax.experimental import pallas as pl
from jax.experimental.pallas import tpu as pltpu


# ----------------------------- Pallas kernel ---------------------------------
def _conv_mm_kernel(p_ref, w_ref, o_ref):
    # p_ref: (TM, K_pad)   im2col patches (+ ones column for bias)
    # w_ref: (K_pad, C_pad) flattened conv weights (+ bias row)
    # o_ref: (TM, C_pad)
    o_ref[...] = jnp.dot(
        p_ref[...], w_ref[...], preferred_element_type=jnp.float32
    ).astype(o_ref.dtype)


def _ceil_to(a, b):
    return -(-a // b) * b


@functools.partial(jax.jit, static_argnames=("stride",))
def conv2d_pallas(x, weight, bias, *, stride=2):
    """Conv2d (padding=0) via im2col + Pallas matmul kernel (bias folded in).

    x:      (N, Cin, H, W)      float32, NCHW (PyTorch layout)
    weight: (Cout, Cin, KH, KW) float32 (PyTorch layout)
    bias:   (Cout,)             float32
    returns (N, Cout, OH, OW)   float32
    """
    N, Cin, H, W = x.shape
    Cout, _, KH, KW = weight.shape
    OH = (H - KH) // stride + 1
    OW = (W - KW) // stride + 1

    M = N * OH * OW
    K = Cin * KH * KW

    # ---- glue: im2col without any transpose ----
    # Stack the (cin, kh, kw) taps on the LAST axis; ordering matches
    # weight.reshape(Cout, Cin*KH*KW).
    taps = [
        x[:, ci,
          kh:kh + stride * (OH - 1) + 1:stride,
          kw:kw + stride * (OW - 1) + 1:stride]          # (N, OH, OW)
        for ci in range(Cin) for kh in range(KH) for kw in range(KW)
    ]
    taps.append(jnp.ones_like(taps[0]))                   # bias column
    P = jnp.stack(taps, axis=-1).reshape(M, K + 1)        # (M, K+1)

    # ---- minimal sublane-aligned padding (no 128-lane padding) ----
    K_pad = _ceil_to(K + 1, 8)                            # 16 for K=9
    C_pad = _ceil_to(Cout, 8)                             # 8  for Cout=3
    TM = min(512, _ceil_to(M, 8))                         # M tile (multiple of 8)
    M_pad = _ceil_to(M, TM)

    if M_pad != M or K_pad != K + 1:
        P = jnp.pad(P.astype(jnp.float32),
                    ((0, M_pad - M), (0, K_pad - (K + 1))))
    else:
        P = P.astype(jnp.float32)

    # weight (Cout, Cin, KH, KW) -> (K, Cout), bias appended as row K
    Wm = weight.reshape(Cout, K).T.astype(jnp.float32)
    Wb = jnp.zeros((K_pad, C_pad), jnp.float32)
    Wb = Wb.at[:K, :Cout].set(Wm)
    Wb = Wb.at[K, :Cout].set(bias.astype(jnp.float32))

    cost = pl.CostEstimate(
        flops=2 * M * K * Cout,
        transcendentals=0,
        bytes_accessed=4 * (M * K + K * Cout + M * Cout),
    )

    out_p = pl.pallas_call(
        _conv_mm_kernel,
        out_shape=jax.ShapeDtypeStruct((M_pad, C_pad), jnp.float32),
        grid=(M_pad // TM,),
        in_specs=[
            pl.BlockSpec((TM, K_pad), lambda i: (i, 0)),
            pl.BlockSpec((K_pad, C_pad), lambda i: (0, 0)),
        ],
        out_specs=pl.BlockSpec((TM, C_pad), lambda i: (i, 0)),
        compiler_params=pltpu.CompilerParams(
            dimension_semantics=("parallel",),
        ),
        cost_estimate=cost,
    )(P, Wb)

    # unpad, reshape back to NCHW (module semantics)
    out = out_p[:M, :Cout].reshape(N, OH, OW, Cout).transpose(0, 3, 1, 2)
    return out


# ------------------------- deterministic parameters ---------------------------
def init_params(key, cin=1, cout=3, kh=3, kw=3):
    # mimic PyTorch's default Conv2d init: U(-1/sqrt(fan_in), 1/sqrt(fan_in))
    fan_in = cin * kh * kw
    bound = 1.0 / np.sqrt(fan_in)
    kw_key, kb_key = jax.random.split(key)
    weight = jax.random.uniform(kw_key, (cout, cin, kh, kw), jnp.float32, -bound, bound)
    bias = jax.random.uniform(kb_key, (cout,), jnp.float32, -bound, bound)
    return weight, bias


if __name__ == "__main__":
    key = jax.random.PRNGKey(0)
    kx, kp = jax.random.split(key)

    # forward implies (N, 1, 10, 10); use a small batch of 2
    x = jax.random.uniform(kx, (2, 1, 10, 10), jnp.float32)
    weight, bias = init_params(kp)

    out = conv2d_pallas(x, weight, bias, stride=2)
    out = jax.block_until_ready(out)
    assert out.shape == (2, 3, 4, 4), out.shape

    # reference check against XLA's conv
    ref = jax.lax.conv_general_dilated(
        x, weight, window_strides=(2, 2), padding="VALID",
        dimension_numbers=("NCHW", "OIHW", "NCHW"),
    ) + bias[None, :, None, None]
    np.testing.assert_allclose(np.asarray(out), np.asarray(ref), rtol=1e-5, atol=1e-5)

    print("KERNEL_OK")
</pallas_src>

<mosaic_0001>
module attributes {stable_mosaic.version = 11 : i64} {
  func.func @_conv_mm_kernel(%arg0: i32, %arg1: memref<32x16xf32, #tpu.memory_space<vmem>>, %arg2: memref<16x8xf32, #tpu.memory_space<vmem>>, %arg3: memref<32x8xf32, #tpu.memory_space<vmem>>) attributes {dimension_semantics = [#tpu.dimension_semantics<parallel>], iteration_bounds = array<i64: 1>, scalar_prefetch = 0 : i64, scratch_operands = 0 : i64, tpu.core_type = #tpu.core_type<tc>, window_params = [{transform_indices = @transform_0, window_bounds = array<i64: 32, 16>}, {pipeline_mode = #tpu.pipeline_mode<synchronous>, transform_indices = @transform_1, window_bounds = array<i64: 16, 8>}, {transform_indices = @transform_2, window_bounds = array<i64: 32, 8>}]} {
    %c0 = arith.constant 0 : index
    %c0_0 = arith.constant 0 : index
    %0 = vector.load %arg1[%c0, %c0_0] : memref<32x16xf32, #tpu.memory_space<vmem>>, vector<32x16xf32>
    %c0_1 = arith.constant 0 : index
    %c0_2 = arith.constant 0 : index
    %1 = vector.load %arg2[%c0_1, %c0_2] : memref<16x8xf32, #tpu.memory_space<vmem>>, vector<16x8xf32>
    %cst = arith.constant dense<0.000000e+00> : vector<32x8xf32>
    %2 = tpu.matmul %0, %1, %cst {dimension_numbers = #tpu.dot_dimension_numbers<[1], [0], [0], [1], [0, 0, 1, 1], [], []>} : vector<32x16xf32>, vector<16x8xf32>, vector<32x8xf32> -> vector<32x8xf32>
    %c0_3 = arith.constant 0 : index
    %c0_4 = arith.constant 0 : index
    %3 = vector.load %arg3[%c0_3, %c0_4] : memref<32x8xf32, #tpu.memory_space<vmem>>, vector<32x8xf32>
    tpu.vector_store %arg3[%c0_3, %c0_4], %2 {strides = array<i32>} : memref<32x8xf32, #tpu.memory_space<vmem>>, vector<32x8xf32>,
    return
  }
  func.func @transform_0(%arg0: i32) -> (i32, i32) {
    %c0_i32 = arith.constant 0 : i32
    %c0_i32_0 = arith.constant 0 : i32
    return %arg0, %c0_i32 : i32, i32
  }
  func.func @transform_1(%arg0: i32) -> (i32, i32) {
    %c0_i32 = arith.constant 0 : i32
    %c0_i32_0 = arith.constant 0 : i32
    %c0_i32_1 = arith.constant 0 : i32
    return %c0_i32, %c0_i32_0 : i32, i32
  }
  func.func @transform_2(%arg0: i32) -> (i32, i32) {
    %c0_i32 = arith.constant 0 : i32
    %c0_i32_0 = arith.constant 0 : i32
    return %arg0, %c0_i32 : i32, i32
  }
}

</mosaic_0001>

<llo_original>
// kernel: conv2d_pallas.1
$region0: #{conv2d_pallas.1}
  #allocation0 [shape = 'u32[]', space=smem, size = 0x4, offset = 0x4, fixed_abs, tag = 'smem constant byte address 0x4 - core index']
  #allocation1 [shape = 'u32[72,128]{1,0:T(1,128)}', space=vmem, size = 0x9000, scoped, tag = 'internal scratch']
  %s0 = inlined_call_operand.vmem [shape: f32[32,16], index: 0, kind: input, shape index: {}]
  %s1 = inlined_call_operand.vmem [shape: f32[16,8], index: 1, kind: input, shape index: {}]
  %s2 = inlined_call_operand.vmem [shape: f32[32,8], index: 2, kind: output, shape index: {}]
  %s3 = sld [smem:[#allocation0]]
  $region18: #{conv2d_pallas.1} parent=0
    _
  %s5 = ssub.s32 1, %s3
  %s6 = scalar_select 0, %s5, %s3
  // Predicated region
  $region2: #{conv2d_pallas.1} parent=0 // pred_check
    _
  $region3: #{conv2d_pallas.1} parent=0 // pred_check_branch
    %8 = sbr.rel (0) target = $region5
  $region4: #{conv2d_pallas.1} parent=0 // pred_region
    _
  $region5: #{conv2d_pallas.1} parent=0 // pred_fallthru
    _
  // Predicated region
  $region6: #{conv2d_pallas.1} parent=0 // pred_check
    _
  $region7: #{conv2d_pallas.1} parent=0 // pred_check_branch
    %10 = sbr.rel (0) target = $region9
  $region8: #{conv2d_pallas.1} parent=0 // pred_region
    _
  $region9: #{conv2d_pallas.1} parent=0 // pred_fallthru
    _
  %v11 = vld [vmem:[%s0] sm:$0xff]
  %v12 = vld [vmem:[%s0 + $0x8] sm:$0xff]
  %v13 = vld [vmem:[%s0 + $0x10] sm:$0xff]
  %v14 = vld [vmem:[%s0 + $0x18] sm:$0xff]
  %v15 = vld [vmem:[%s1] sm:$0xff]
  %v16 = vld [vmem:[%s1 + $0x8] sm:$0xff]
  %vm17 = vcmask 130048
  %v19 = vsel %vm17, %v11, 0
  %v22 = vsel %vm17, %v12, 0
  %v25 = vsel %vm17, %v13, 0
  %v28 = vsel %vm17, %v14, 0
  %30 = vmatpush.msra.mxu0 0.0
  %31 = vmatpush.msra.mxu0 0.0
  %32 = vmatpush.msra.mxu0 0.0
  %33 = vmatpush.msra.mxu0 0.0
  %34 = vmatpush.msra.mxu0 0.0
  %35 = vmatpush.msra.mxu0 0.0
  %36 = vmatpush.msra.mxu0 0.0
  %37 = vmatpush.msra.mxu0 0.0
  %38 = vmatpush.msra.mxu0 0.0
  %39 = vmatpush.msra.mxu0 0.0
  %40 = vmatpush.msra.mxu0 0.0
  %41 = vmatpush.msra.mxu0 0.0
  %42 = vmatpush.msra.mxu0 0.0
  %43 = vmatpush.msra.mxu0 0.0
  %44 = vmatpush.msra.mxu0 %v16
  %45 = vmatpush.msra.mxu0 %v15
  %46 = vmatmul.f32.gmra.mxu0 %v19
  %v47 = vpop.f32.mrf.mxu0
  %v48 = vadd.f32 0.0, %v47
  %49 = vmatmul.f32.gmra.mxu0 %v22
  %v50 = vpop.f32.mrf.mxu0
  %v51 = vadd.f32 0.0, %v50
  %52 = vmatmul.f32.gmra.mxu0 %v25
  %v53 = vpop.f32.mrf.mxu0
  %v54 = vadd.f32 0.0, %v53
  %55 = vmatmul.f32.gmra.mxu0 %v28
  %v56 = vpop.f32.mrf.mxu0
  %v57 = vadd.f32 0.0, %v56
  %58 = vdwg.mxu0
  %vm59 = vcmask 64512
  %60 = vst.msk [vmem:[%s2] sm:$0xff] %vm59, %v48
  %61 = vst.msk [vmem:[%s2 + $0x8] sm:$0xff] %vm59, %v51
  %62 = vst.msk [vmem:[%s2 + $0x10] sm:$0xff] %vm59, %v54
  %63 = vst.msk [vmem:[%s2 + $0x18] sm:$0xff] %vm59, %v57
  // Predicated region
  $region10: #{conv2d_pallas.1} parent=0 // pred_check
    _
  $region11: #{conv2d_pallas.1} parent=0 // pred_check_branch
    %65 = sbr.rel (0) target = $region13
  $region12: #{conv2d_pallas.1} parent=0 // pred_region
    _
  $region13: #{conv2d_pallas.1} parent=0 // pred_fallthru
    _
  // Predicated region
  $region14: #{conv2d_pallas.1} parent=0 // pred_check
    _
  $region15: #{conv2d_pallas.1} parent=0 // pred_check_branch
    %67 = sbr.rel (0) target = $region17
  $region16: #{conv2d_pallas.1} parent=0 // pred_region
    _
  $region17: #{conv2d_pallas.1} parent=0 // pred_fallthru
    _

</llo_original>
